<compile_context>
chip_gen: v6e
topology: v6e:2x2x1
jax: 0.10.0
libtpu: 0.0.40
codegen_flags: <defaults>
</compile_context>

<pallas_src>
import jax
import jax.numpy as jnp
from jax.experimental import pallas as pl
from jax.experimental.pallas import tpu as pltpu


def _round_up(x, m):
    return ((x + m - 1) // m) * m


def mlp_kernel(x_ref, w1_ref, b1_ref, w2_ref, b2_ref, w3_ref, b3_ref, o_ref):
    # Per-tile forward pass. MXU matmuls take bf16 operands with f32 accumulation;
    # the bias-add / ReLU epilogue stays in f32 (v5e VPU has no bf16 path).
    x = x_ref[...]                                                        # [TB, 31] bf16
    h1 = jnp.dot(x, w1_ref[...], preferred_element_type=jnp.float32)     # [TB, 128] f32
    h1 = jnp.maximum(h1 + b1_ref[...], 0.0)
    h2 = jnp.dot(h1.astype(jnp.bfloat16), w2_ref[...],
                 preferred_element_type=jnp.float32)                      # [TB, 64] f32
    h2 = jnp.maximum(h2 + b2_ref[...], 0.0)
    out = jnp.dot(h2.astype(jnp.bfloat16), w3_ref[...],
                  preferred_element_type=jnp.float32)                     # [TB, 11] f32
    o_ref[...] = (out + b3_ref[...]).astype(o_ref.dtype)


def fcnn_forward(x, params, *, block_rows=512, xla_fallback_batch=0):
    """Forward pass of FCNNModel.

    x: [B, num_in_features] float32 (cast to bf16 for the MXU inside).
    params: dict with bf16 transposed weights (w*t) and f32 biases (b*).
    block_rows: batch-tile size (multiple of 8; 512-2048 is the sweet spot;
                sized comfortably within v7x's 32 MiB default scoped VMEM).
    xla_fallback_batch: if B < this threshold, use the fused pure-JAX path
                (launch/DMA overhead dominates tiny batches). Default 0 so the
                Pallas kernel always runs (needed for this test script).
    """
    w1t, b1 = params["w1t"], params["b1"]
    w2t, b2 = params["w2t"], params["b2"]
    w3t, b3 = params["w3t"], params["b3"]

    B, f_in = x.shape
    f_h1 = w1t.shape[1]
    f_h2 = w2t.shape[1]
    f_out = w3t.shape[1]

    if B < xla_fallback_batch:
        return fcnn_reference(x, params)

    # Batch tile: multiple of 8 (sublane rule), clamped so small batches don't
    # allocate oversized padded blocks.
    tb = min(_round_up(block_rows, 8), _round_up(B, 8))
    grid = (pl.cdiv(B, tb),)

    x_bf16 = x.astype(jnp.bfloat16)

    # x / out stream over the batch grid; weights & biases are resident
    # (constant index_map -> fetched once, reused every step).
    x_spec = pl.BlockSpec((tb, f_in), lambda i: (i, 0))
    out_spec = pl.BlockSpec((tb, f_out), lambda i: (i, 0))

    def resident(shape):
        return pl.BlockSpec(shape, lambda i: (0, 0))

    param_bytes = sum(int(p.size) * p.dtype.itemsize
                      for p in (w1t, b1, w2t, b2, w3t, b3))
    cost = pl.CostEstimate(
        flops=2 * B * (f_in * f_h1 + f_h1 * f_h2 + f_h2 * f_out),
        bytes_accessed=B * f_in * 2 + B * f_out * 4 + param_bytes,
        transcendentals=0,
    )

    return pl.pallas_call(
        mlp_kernel,
        out_shape=jax.ShapeDtypeStruct((B, f_out), jnp.float32),
        grid=grid,
        in_specs=[
            x_spec,
            resident(w1t.shape), resident(b1.shape),
            resident(w2t.shape), resident(b2.shape),
            resident(w3t.shape), resident(b3.shape),
        ],
        out_specs=out_spec,
        compiler_params=pltpu.CompilerParams(
            dimension_semantics=("parallel",),
        ),
        cost_estimate=cost,
    )(x_bf16, w1t, b1, w2t, b2, w3t, b3)


def init_params(key, num_in_features=31, num_out_features=11):
    """Deterministic init mimicking PyTorch nn.Linear default (uniform +/- 1/sqrt(fan_in)).

    Weights are stored transposed [in, out] and in bf16 (MXU-native); biases stay f32.
    """
    def linear(key, fan_in, fan_out):
        kw, kb = jax.random.split(key)
        bound = 1.0 / jnp.sqrt(fan_in)
        w_t = jax.random.uniform(kw, (fan_in, fan_out), jnp.float32, -bound, bound)
        b = jax.random.uniform(kb, (1, fan_out), jnp.float32, -bound, bound)
        return w_t.astype(jnp.bfloat16), b

    k1, k2, k3 = jax.random.split(key, 3)
    w1t, b1 = linear(k1, num_in_features, 128)
    w2t, b2 = linear(k2, 128, 64)
    w3t, b3 = linear(k3, 64, num_out_features)
    return {"w1t": w1t, "b1": b1, "w2t": w2t, "b2": b2, "w3t": w3t, "b3": b3}


def fcnn_reference(x, params):
    """Pure-JAX reference with the same bf16-input / f32-accumulate numerics."""
    def dot(a, w):
        return jnp.dot(a.astype(jnp.bfloat16), w.astype(jnp.bfloat16),
                       preferred_element_type=jnp.float32)

    h = jnp.maximum(dot(x, params["w1t"]) + params["b1"], 0.0)
    h = jnp.maximum(dot(h, params["w2t"]) + params["b2"], 0.0)
    return dot(h, params["w3t"]) + params["b3"]


if __name__ == "__main__":
    key = jax.random.PRNGKey(0)
    kx, kp = jax.random.split(key)

    NUM_IN, NUM_OUT = 31, 11
    params = init_params(kp, NUM_IN, NUM_OUT)

    # Small single-tile case (TB clamps to 8).
    B = 8
    x = jax.random.normal(kx, (B, NUM_IN), jnp.float32)
    out = fcnn_forward(x, params)
    out = jax.block_until_ready(out)
    ref = fcnn_reference(x, params)
    assert out.shape == (B, NUM_OUT), out.shape
    assert jnp.allclose(out, ref, atol=2e-3, rtol=2e-3), "mismatch vs reference (B=8)"

    # Multi-tile case exercising the batch grid + resident weights + ragged tail.
    B2 = 52
    x2 = jax.random.normal(jax.random.PRNGKey(1), (B2, NUM_IN), jnp.float32)
    out2 = jax.block_until_ready(fcnn_forward(x2, params, block_rows=16))
    ref2 = fcnn_reference(x2, params)
    assert out2.shape == (B2, NUM_OUT), out2.shape
    assert jnp.allclose(out2, ref2, atol=2e-3, rtol=2e-3), "mismatch vs reference (B=52)"

    print("KERNEL_OK")
</pallas_src>

<mosaic_0001>
module attributes {stable_mosaic.version = 11 : i64} {
  func.func @mlp_kernel(%arg0: i32, %arg1: memref<8x31xbf16, #tpu.memory_space<vmem>>, %arg2: memref<31x128xbf16, #tpu.memory_space<vmem>>, %arg3: memref<1x128xf32, #tpu.memory_space<vmem>>, %arg4: memref<128x64xbf16, #tpu.memory_space<vmem>>, %arg5: memref<1x64xf32, #tpu.memory_space<vmem>>, %arg6: memref<64x11xbf16, #tpu.memory_space<vmem>>, %arg7: memref<1x11xf32, #tpu.memory_space<vmem>>, %arg8: memref<8x11xf32, #tpu.memory_space<vmem>>) attributes {dimension_semantics = [#tpu.dimension_semantics<parallel>], iteration_bounds = array<i64: 1>, scalar_prefetch = 0 : i64, scratch_operands = 0 : i64, tpu.core_type = #tpu.core_type<tc>, window_params = [{transform_indices = @transform_0, window_bounds = array<i64: 8, 31>}, {pipeline_mode = #tpu.pipeline_mode<synchronous>, transform_indices = @transform_1, window_bounds = array<i64: 31, 128>}, {pipeline_mode = #tpu.pipeline_mode<synchronous>, transform_indices = @transform_2, window_bounds = array<i64: 1, 128>}, {pipeline_mode = #tpu.pipeline_mode<synchronous>, transform_indices = @transform_3, window_bounds = array<i64: 128, 64>}, {pipeline_mode = #tpu.pipeline_mode<synchronous>, transform_indices = @transform_4, window_bounds = array<i64: 1, 64>}, {pipeline_mode = #tpu.pipeline_mode<synchronous>, transform_indices = @transform_5, window_bounds = array<i64: 64, 11>}, {pipeline_mode = #tpu.pipeline_mode<synchronous>, transform_indices = @transform_6, window_bounds = array<i64: 1, 11>}, {transform_indices = @transform_7, window_bounds = array<i64: 8, 11>}]} {
    %c0 = arith.constant 0 : index
    %c0_0 = arith.constant 0 : index
    %0 = vector.load %arg1[%c0, %c0_0] : memref<8x31xbf16, #tpu.memory_space<vmem>>, vector<8x31xbf16>
    %c0_1 = arith.constant 0 : index
    %c0_2 = arith.constant 0 : index
    %1 = vector.load %arg2[%c0_1, %c0_2] : memref<31x128xbf16, #tpu.memory_space<vmem>>, vector<31x128xbf16>
    %cst = arith.constant dense<0.000000e+00> : vector<8x128xf32>
    %2 = tpu.matmul %0, %1, %cst {dimension_numbers = #tpu.dot_dimension_numbers<[1], [0], [0], [1], [0, 0, 1, 1], [], []>} : vector<8x31xbf16>, vector<31x128xbf16>, vector<8x128xf32> -> vector<8x128xf32>
    %c0_3 = arith.constant 0 : index
    %c0_4 = arith.constant 0 : index
    %3 = vector.load %arg3[%c0_3, %c0_4] : memref<1x128xf32, #tpu.memory_space<vmem>>, vector<1x128xf32>
    %4 = vector.broadcast %3 : vector<1x128xf32> to vector<8x128xf32>
    %5 = arith.addf %2, %4 : vector<8x128xf32>
    %cst_5 = arith.constant 0.000000e+00 : f32
    %6 = vector.broadcast %cst_5 : f32 to vector<8x128xf32>
    %7 = arith.maximumf %5, %6 : vector<8x128xf32>
    %8 = arith.truncf %7 : vector<8x128xf32> to vector<8x128xbf16>
    %c0_6 = arith.constant 0 : index
    %c0_7 = arith.constant 0 : index
    %9 = vector.load %arg4[%c0_6, %c0_7] : memref<128x64xbf16, #tpu.memory_space<vmem>>, vector<128x64xbf16>
    %cst_8 = arith.constant dense<0.000000e+00> : vector<8x64xf32>
    %10 = tpu.matmul %8, %9, %cst_8 {dimension_numbers = #tpu.dot_dimension_numbers<[1], [0], [0], [1], [0, 0, 1, 1], [], []>} : vector<8x128xbf16>, vector<128x64xbf16>, vector<8x64xf32> -> vector<8x64xf32>
    %c0_9 = arith.constant 0 : index
    %c0_10 = arith.constant 0 : index
    %11 = vector.load %arg5[%c0_9, %c0_10] : memref<1x64xf32, #tpu.memory_space<vmem>>, vector<1x64xf32>
    %12 = vector.broadcast %11 : vector<1x64xf32> to vector<8x64xf32>
    %13 = arith.addf %10, %12 : vector<8x64xf32>
    %cst_11 = arith.constant 0.000000e+00 : f32
    %14 = vector.broadcast %cst_11 : f32 to vector<8x64xf32>
    %15 = arith.maximumf %13, %14 : vector<8x64xf32>
    %16 = arith.truncf %15 : vector<8x64xf32> to vector<8x64xbf16>
    %c0_12 = arith.constant 0 : index
    %c0_13 = arith.constant 0 : index
    %17 = vector.load %arg6[%c0_12, %c0_13] : memref<64x11xbf16, #tpu.memory_space<vmem>>, vector<64x11xbf16>
    %cst_14 = arith.constant dense<0.000000e+00> : vector<8x11xf32>
    %18 = tpu.matmul %16, %17, %cst_14 {dimension_numbers = #tpu.dot_dimension_numbers<[1], [0], [0], [1], [0, 0, 1, 1], [], []>} : vector<8x64xbf16>, vector<64x11xbf16>, vector<8x11xf32> -> vector<8x11xf32>
    %c0_15 = arith.constant 0 : index
    %c0_16 = arith.constant 0 : index
    %19 = vector.load %arg7[%c0_15, %c0_16] : memref<1x11xf32, #tpu.memory_space<vmem>>, vector<1x11xf32>
    %20 = vector.broadcast %19 : vector<1x11xf32> to vector<8x11xf32>
    %21 = arith.addf %18, %20 : vector<8x11xf32>
    %c0_17 = arith.constant 0 : index
    %c0_18 = arith.constant 0 : index
    %22 = vector.load %arg8[%c0_17, %c0_18] : memref<8x11xf32, #tpu.memory_space<vmem>>, vector<8x11xf32>
    tpu.vector_store %arg8[%c0_17, %c0_18], %21 {strides = array<i32>} : memref<8x11xf32, #tpu.memory_space<vmem>>, vector<8x11xf32>,
    return
  }
  func.func @transform_0(%arg0: i32) -> (i32, i32) {
    %c0_i32 = arith.constant 0 : i32
    %c0_i32_0 = arith.constant 0 : i32
    return %arg0, %c0_i32 : i32, i32
  }
  func.func @transform_1(%arg0: i32) -> (i32, i32) {
    %c0_i32 = arith.constant 0 : i32
    %c0_i32_0 = arith.constant 0 : i32
    %c0_i32_1 = arith.constant 0 : i32
    return %c0_i32, %c0_i32_0 : i32, i32
  }
  func.func @transform_2(%arg0: i32) -> (i32, i32) {
    %c0_i32 = arith.constant 0 : i32
    %c0_i32_0 = arith.constant 0 : i32
    %c0_i32_1 = arith.constant 0 : i32
    return %c0_i32, %c0_i32_0 : i32, i32
  }
  func.func @transform_3(%arg0: i32) -> (i32, i32) {
    %c0_i32 = arith.constant 0 : i32
    %c0_i32_0 = arith.constant 0 : i32
    %c0_i32_1 = arith.constant 0 : i32
    return %c0_i32, %c0_i32_0 : i32, i32
  }
  func.func @transform_4(%arg0: i32) -> (i32, i32) {
    %c0_i32 = arith.constant 0 : i32
    %c0_i32_0 = arith.constant 0 : i32
    %c0_i32_1 = arith.constant 0 : i32
    return %c0_i32, %c0_i32_0 : i32, i32
  }
  func.func @transform_5(%arg0: i32) -> (i32, i32) {
    %c0_i32 = arith.constant 0 : i32
    %c0_i32_0 = arith.constant 0 : i32
    %c0_i32_1 = arith.constant 0 : i32
    return %c0_i32, %c0_i32_0 : i32, i32
  }
  func.func @transform_6(%arg0: i32) -> (i32, i32) {
    %c0_i32 = arith.constant 0 : i32
    %c0_i32_0 = arith.constant 0 : i32
    %c0_i32_1 = arith.constant 0 : i32
    return %c0_i32, %c0_i32_0 : i32, i32
  }
  func.func @transform_7(%arg0: i32) -> (i32, i32) {
    %c0_i32 = arith.constant 0 : i32
    %c0_i32_0 = arith.constant 0 : i32
    return %arg0, %c0_i32 : i32, i32
  }
}

</mosaic_0001>

<llo_original>
// kernel: tpu_custom_call.1
$region0: #{tpu_custom_call.1}
  #allocation0 [shape = 'u32[]', space=smem, size = 0x4, offset = 0x4, fixed_abs, tag = 'smem constant byte address 0x4 - core index']
  #allocation1 [shape = 'u32[144,128]{1,0:T(1,128)}', space=vmem, size = 0x12000, scoped, tag = 'internal scratch']
  %s0 = inlined_call_operand.vmem [shape: bf16[8,31], index: 0, kind: input, shape index: {}]
  %s1 = inlined_call_operand.vmem [shape: bf16[31,128], index: 1, kind: input, shape index: {}]
  %s2 = inlined_call_operand.vmem [shape: f32[1,128], index: 2, kind: input, shape index: {}]
  %s3 = inlined_call_operand.vmem [shape: bf16[128,64], index: 3, kind: input, shape index: {}]
  %s4 = inlined_call_operand.vmem [shape: f32[1,64], index: 4, kind: input, shape index: {}]
  %s5 = inlined_call_operand.vmem [shape: bf16[64,11], index: 5, kind: input, shape index: {}]
  %s6 = inlined_call_operand.vmem [shape: f32[1,11], index: 6, kind: input, shape index: {}]
  %s7 = inlined_call_operand.hbm [shape: f32[8,11], index: 7, kind: output, shape index: {}]
  %s8 = sld [smem:[#allocation0]]
  $region38: #{tpu_custom_call.1} parent=0
    _
  %s10 = ssub.s32 1, %s8
  %s11 = scalar_select 0, %s10, %s8
  $region1: #{tpu_custom_call.1} parent=0
    #allocation2 [shape = 'u8[4096]{0}', space=vmem, size = 0x1000, scoped, tag = 'output window, operand 0, single buffered']
    #allocation3 [shape = 's32[1]{0}', space=sflag, size = 0x4, scoped, tag = 'scoped memory for tpu_custom_call.1']
    %12 = vsyncpa [#allocation3], 0
    // Predicated region
    $region2: #{tpu_custom_call.1} parent=1 // pred_check
      _
    $region3: #{tpu_custom_call.1} parent=1 // pred_check_branch
      %14 = sbr.rel (0) target = $region5
    $region4: #{tpu_custom_call.1} parent=1 // pred_region
      _
    $region5: #{tpu_custom_call.1} parent=1 // pred_fallthru
      _
    // Predicated region
    $region6: #{tpu_custom_call.1} parent=1 // pred_check
      _
    $region7: #{tpu_custom_call.1} parent=1 // pred_check_branch
      %16 = sbr.rel (0) target = $region9
    $region8: #{tpu_custom_call.1} parent=1 // pred_region
      _
    $region9: #{tpu_custom_call.1} parent=1 // pred_fallthru
      _
    // Predicated region
    $region10: #{tpu_custom_call.1} parent=1 // pred_check
      _
    $region11: #{tpu_custom_call.1} parent=1 // pred_check_branch
      %18 = sbr.rel (0) target = $region13
    $region12: #{tpu_custom_call.1} parent=1 // pred_region
      _
    $region13: #{tpu_custom_call.1} parent=1 // pred_fallthru
      _
    // Predicated region
    $region14: #{tpu_custom_call.1} parent=1 // pred_check
      _
    $region15: #{tpu_custom_call.1} parent=1 // pred_check_branch
      %20 = sbr.rel (0) target = $region17
    $region16: #{tpu_custom_call.1} parent=1 // pred_region
      _
    $region17: #{tpu_custom_call.1} parent=1 // pred_fallthru
      _
    // Predicated region
    $region18: #{tpu_custom_call.1} parent=1 // pred_check
      _
    $region19: #{tpu_custom_call.1} parent=1 // pred_check_branch
      %22 = sbr.rel (0) target = $region21
    $region20: #{tpu_custom_call.1} parent=1 // pred_region
      _
    $region21: #{tpu_custom_call.1} parent=1 // pred_fallthru
      _
    // Predicated region
    $region22: #{tpu_custom_call.1} parent=1 // pred_check
      _
    $region23: #{tpu_custom_call.1} parent=1 // pred_check_branch
      %24 = sbr.rel (0) target = $region25
    $region24: #{tpu_custom_call.1} parent=1 // pred_region
      _
    $region25: #{tpu_custom_call.1} parent=1 // pred_fallthru
      _
    // Predicated region
    $region26: #{tpu_custom_call.1} parent=1 // pred_check
      _
    $region27: #{tpu_custom_call.1} parent=1 // pred_check_branch
      %26 = sbr.rel (0) target = $region29
    $region28: #{tpu_custom_call.1} parent=1 // pred_region
      _
    $region29: #{tpu_custom_call.1} parent=1 // pred_fallthru
      _
    %v28 = vld [vmem:[%s0] sm:$0xf]
    %v29 = vld [vmem:[%s1] sm:$0xf]
    %v30 = vld [vmem:[%s1 + $0x4] sm:$0xf]
    %v31 = vld [vmem:[%s1 + $0x8] sm:$0xf]
    %v32 = vld [vmem:[%s1 + $0xc] sm:$0xf]
    %v33 = vld [vmem:[%s2] sm:$0x1]
    %v35 = vlaneseq
    %v36 = vshrl.u32 %v35, 7
    %v37 = vsub.s32 0, %v36
    %v38 = vrot.slane %v33, %v37
    %v44 = vunpack.c.l.b16 %v29
    %v45 = vunpack.c.l.b16 %v30
    %v46 = vunpack.c.l.b16 %v31
    %v47 = vunpack.c.l.b16 %v32
    %v48 = vpack.c.b16 %v45, %v44
    %v49 = vpack.c.b16 %v47, %v46
    %vm51 = vcmask 252928
    %v53 = vsel %vm51, %v28, 0
    %vm55 = vcmask 1046528
    %vm56 = vcmask 1047552
    %v57 = vsel %vm55, 4294967295, 65535
    %v58 = vsel %vm56, %v57, 0
    %v60 = vand.u32 %v49, %v58
    %62 = vmatprep.subr.bf16.mxu0 0
    %63 = vmatpush1.bf16.msra.mxu0 0
    %64 = vmatprep.subr.bf16.mxu0 0
    %65 = vmatpush1.bf16.msra.mxu0 0
    %66 = vmatprep.subr.bf16.mxu0 0
    %67 = vmatpush1.bf16.msra.mxu0 0
    %68 = vmatprep.subr.bf16.mxu0 0
    %69 = vmatpush1.bf16.msra.mxu0 0
    %70 = vmatprep.subr.bf16.mxu0 0
    %71 = vmatpush1.bf16.msra.mxu0 0
    %72 = vmatprep.subr.bf16.mxu0 0
    %73 = vmatpush1.bf16.msra.mxu0 0
    %74 = vmatprep.subr.bf16.mxu0 0
    %75 = vmatpush1.bf16.msra.mxu0 %v60
    %76 = vmatprep.subr.bf16.mxu0 0
    %77 = vmatpush1.bf16.msra.mxu0 %v48
    %78 = vmatprep.subr.bf16.mxu0 0
    %79 = vmatpush2.bf16.msra.mxu0 0
    %80 = vmatprep.subr.bf16.mxu0 0
    %81 = vmatpush2.bf16.msra.mxu0 0
    %82 = vmatprep.subr.bf16.mxu0 0
    %83 = vmatpush2.bf16.msra.mxu0 0
    %84 = vmatprep.subr.bf16.mxu0 0
    %85 = vmatpush2.bf16.msra.mxu0 0
    %86 = vmatprep.subr.bf16.mxu0 0
    %87 = vmatpush2.bf16.msra.mxu0 0
    %88 = vmatprep.subr.bf16.mxu0 0
    %89 = vmatpush2.bf16.msra.mxu0 0
    %90 = vmatprep.subr.bf16.mxu0 0
    %91 = vmatpush2.bf16.msra.mxu0 0
    %92 = vmatprep.subr.bf16.mxu0 0
    %93 = vmatpush2.bf16.msra.mxu0 0
    %94 = vmatprep.mubr.bf16.mxu0 0
    %95 = vmatmul.mubr.bf16.gmra.mxu0 %v53
    %v96 = vpop.f32.mrf.mxu0
    %v97 = vadd.f32 %v38, %v96
    %v98 = vpop.f32.mrf.mxu0
    %v99 = vpop.f32.mrf.mxu0
    %v100 = vpop.f32.mrf.mxu0
    %101 = vdwg.mxu0
    %v102 = vmax.f32 %v97, 0.0
    %v103 = vpack.c.bf16 %v102, %v102
    %v104 = vld [vmem:[%s3] sm:$0xf]
    %v105 = vld [vmem:[%s3 + $0x4] sm:$0xf]
    %v106 = vld [vmem:[%s3 + $0x8] sm:$0xf]
    %v107 = vld [vmem:[%s3 + $0xc] sm:$0xf]
    %v108 = vld [vmem:[%s3 + $0x10] sm:$0xf]
    %v109 = vld [vmem:[%s3 + $0x14] sm:$0xf]
    %v110 = vld [vmem:[%s3 + $0x18] sm:$0xf]
    %v111 = vld [vmem:[%s3 + $0x1c] sm:$0xf]
    %v112 = vld [vmem:[%s3 + $0x20] sm:$0xf]
    %v113 = vld [vmem:[%s3 + $0x24] sm:$0xf]
    %v114 = vld [vmem:[%s3 + $0x28] sm:$0xf]
    %v115 = vld [vmem:[%s3 + $0x2c] sm:$0xf]
    %v116 = vld [vmem:[%s3 + $0x30] sm:$0xf]
    %v117 = vld [vmem:[%s3 + $0x34] sm:$0xf]
    %v118 = vld [vmem:[%s3 + $0x38] sm:$0xf]
    %v119 = vld [vmem:[%s3 + $0x3c] sm:$0xf]
    %v120 = vld [vmem:[%s4] sm:$0x1]
    %v122 = vlaneseq
    %v123 = vshrl.u32 %v122, 7
    %v124 = vsub.s32 0, %v123
    %v125 = vrot.slane %v120, %v124
    %v143 = vunpack.c.l.b16 %v104
    %v144 = vunpack.c.l.b16 %v105
    %v145 = vunpack.c.l.b16 %v106
    %v146 = vunpack.c.l.b16 %v107
    %v147 = vunpack.c.l.b16 %v108
    %v148 = vunpack.c.l.b16 %v109
    %v149 = vunpack.c.l.b16 %v110
    %v150 = vunpack.c.l.b16 %v111
    %v151 = vunpack.c.l.b16 %v112
    %v152 = vunpack.c.l.b16 %v113
    %v153 = vunpack.c.l.b16 %v114
    %v154 = vunpack.c.l.b16 %v115
    %v155 = vunpack.c.l.b16 %v116
    %v156 = vunpack.c.l.b16 %v117
    %v157 = vunpack.c.l.b16 %v118
    %v158 = vunpack.c.l.b16 %v119
    %v159 = vpack.c.b16 %v144, %v143
    %v160 = vpack.c.b16 %v146, %v145
    %v161 = vpack.c.b16 %v148, %v147
    %v162 = vpack.c.b16 %v150, %v149
    %v163 = vpack.c.b16 %v152, %v151
    %v164 = vpack.c.b16 %v154, %v153
    %v165 = vpack.c.b16 %v156, %v155
    %v166 = vpack.c.b16 %v158, %v157
    %175 = vmatprep.subr.bf16.mxu0 0
    %176 = vmatpush1.bf16.msra.mxu0 %v166
    %177 = vmatprep.subr.bf16.mxu0 0
    %178 = vmatpush1.bf16.msra.mxu0 %v165
    %179 = vmatprep.subr.bf16.mxu0 0
    %180 = vmatpush1.bf16.msra.mxu0 %v164
    %181 = vmatprep.subr.bf16.mxu0 0
    %182 = vmatpush1.bf16.msra.mxu0 %v163
    %183 = vmatprep.subr.bf16.mxu0 0
    %184 = vmatpush1.bf16.msra.mxu0 %v162
    %185 = vmatprep.subr.bf16.mxu0 0
    %186 = vmatpush1.bf16.msra.mxu0 %v161
    %187 = vmatprep.subr.bf16.mxu0 0
    %188 = vmatpush1.bf16.msra.mxu0 %v160
    %189 = vmatprep.subr.bf16.mxu0 0
    %190 = vmatpush1.bf16.msra.mxu0 %v159
    %191 = vmatprep.subr.bf16.mxu0 0
    %192 = vmatpush2.bf16.msra.mxu0 0
    %193 = vmatprep.subr.bf16.mxu0 0
    %194 = vmatpush2.bf16.msra.mxu0 0
    %195 = vmatprep.subr.bf16.mxu0 0
    %196 = vmatpush2.bf16.msra.mxu0 0
    %197 = vmatprep.subr.bf16.mxu0 0
    %198 = vmatpush2.bf16.msra.mxu0 0
    %199 = vmatprep.subr.bf16.mxu0 0
    %200 = vmatpush2.bf16.msra.mxu0 0
    %201 = vmatprep.subr.bf16.mxu0 0
    %202 = vmatpush2.bf16.msra.mxu0 0
    %203 = vmatprep.subr.bf16.mxu0 0
    %204 = vmatpush2.bf16.msra.mxu0 0
    %205 = vmatprep.subr.bf16.mxu0 0
    %206 = vmatpush2.bf16.msra.mxu0 0
    %207 = vmatprep.mubr.bf16.mxu0 0
    %208 = vmatmul.mubr.bf16.gmra.mxu0 %v103
    %v209 = vpop.f32.mrf.mxu0
    %v210 = vadd.f32 %v125, %v209
    %v211 = vpop.f32.mrf.mxu0
    %v212 = vpop.f32.mrf.mxu0
    %v213 = vpop.f32.mrf.mxu0
    %214 = vdwg.mxu0
    %v215 = vmax.f32 %v210, 0.0
    %v216 = vpack.c.bf16 %v215, %v215
    %v217 = vld [vmem:[%s5] sm:$0xf]
    %v218 = vld [vmem:[%s5 + $0x4] sm:$0xf]
    %v219 = vld [vmem:[%s5 + $0x8] sm:$0xf]
    %v220 = vld [vmem:[%s5 + $0xc] sm:$0xf]
    %v221 = vld [vmem:[%s5 + $0x10] sm:$0xf]
    %v222 = vld [vmem:[%s5 + $0x14] sm:$0xf]
    %v223 = vld [vmem:[%s5 + $0x18] sm:$0xf]
    %v224 = vld [vmem:[%s5 + $0x1c] sm:$0xf]
    %v225 = vld [vmem:[%s6] sm:$0x1]
    %v227 = vlaneseq
    %v228 = vshrl.u32 %v227, 7
    %v229 = vsub.s32 0, %v228
    %v230 = vrot.slane %v225, %v229
    %v240 = vunpack.c.l.b16 %v217
    %v241 = vunpack.c.l.b16 %v218
    %v242 = vunpack.c.l.b16 %v219
    %v243 = vunpack.c.l.b16 %v220
    %v244 = vunpack.c.l.b16 %v221
    %v245 = vunpack.c.l.b16 %v222
    %v246 = vunpack.c.l.b16 %v223
    %v247 = vunpack.c.l.b16 %v224
    %v248 = vpack.c.b16 %v241, %v240
    %v249 = vpack.c.b16 %v243, %v242
    %v250 = vpack.c.b16 %v245, %v244
    %v251 = vpack.c.b16 %v247, %v246
    %vm256 = vcmask 523264
    %v258 = vsel %vm256, %v216, 0
    %260 = vmatprep.subr.bf16.mxu0 0
    %261 = vmatpush1.bf16.msra.mxu0 0
    %262 = vmatprep.subr.bf16.mxu0 0
    %263 = vmatpush1.bf16.msra.mxu0 0
    %264 = vmatprep.subr.bf16.mxu0 0
    %265 = vmatpush1.bf16.msra.mxu0 0
    %266 = vmatprep.subr.bf16.mxu0 0
    %267 = vmatpush1.bf16.msra.mxu0 0
    %268 = vmatprep.subr.bf16.mxu0 0
    %269 = vmatpush1.bf16.msra.mxu0 %v251
    %270 = vmatprep.subr.bf16.mxu0 0
    %271 = vmatpush1.bf16.msra.mxu0 %v250
    %272 = vmatprep.subr.bf16.mxu0 0
    %273 = vmatpush1.bf16.msra.mxu0 %v249
    %274 = vmatprep.subr.bf16.mxu0 0
    %275 = vmatpush1.bf16.msra.mxu0 %v248
    %276 = vmatprep.subr.bf16.mxu0 0
    %277 = vmatpush2.bf16.msra.mxu0 0
    %278 = vmatprep.subr.bf16.mxu0 0
    %279 = vmatpush2.bf16.msra.mxu0 0
    %280 = vmatprep.subr.bf16.mxu0 0
    %281 = vmatpush2.bf16.msra.mxu0 0
    %282 = vmatprep.subr.bf16.mxu0 0
    %283 = vmatpush2.bf16.msra.mxu0 0
    %284 = vmatprep.subr.bf16.mxu0 0
    %285 = vmatpush2.bf16.msra.mxu0 0
    %286 = vmatprep.subr.bf16.mxu0 0
    %287 = vmatpush2.bf16.msra.mxu0 0
    %288 = vmatprep.subr.bf16.mxu0 0
    %289 = vmatpush2.bf16.msra.mxu0 0
    %290 = vmatprep.subr.bf16.mxu0 0
    %291 = vmatpush2.bf16.msra.mxu0 0
    %292 = vmatprep.mubr.bf16.mxu0 0
    %293 = vmatmul.mubr.bf16.gmra.mxu0 %v258
    %v294 = vpop.f32.mrf.mxu0
    %v295 = vadd.f32 %v230, %v294
    %v296 = vpop.f32.mrf.mxu0
    %v297 = vpop.f32.mrf.mxu0
    %v298 = vpop.f32.mrf.mxu0
    %299 = vdwg.mxu0
    %vm300 = vcmask 89088
    %301 = vst.msk [vmem:[#allocation2] sm:$0xff] %vm300, %v295
    // Predicated region
    $region30: #{tpu_custom_call.1} parent=1 // pred_check
      _
    $region31: #{tpu_custom_call.1} parent=1 // pred_check_branch
      %303 = sbr.rel (0) target = $region33
    $region32: #{tpu_custom_call.1} parent=1 // pred_region
      %s305 = ssub.s32 128, 128
      %306 = vsyncadd [#allocation3], %s305
      %s308 = sshll.u32 [#allocation2], 4
      %s309 = int_to_ptr.vmem [resolvable:$true] %s308
      %311 = dma.vmem_to_hbm [thread:$0]  %s309, 128, %s7, [#allocation3]
    $region33: #{tpu_custom_call.1} parent=1 // pred_fallthru
      _
    // Predicated region
    $region34: #{tpu_custom_call.1} parent=1 // pred_check
      _
    $region35: #{tpu_custom_call.1} parent=1 // pred_check_branch
      %313 = sbr.rel (0) target = $region37
    $region36: #{tpu_custom_call.1} parent=1 // pred_region
      %314 = dma.done [#allocation3], 128
    $region37: #{tpu_custom_call.1} parent=1 // pred_fallthru
      _
    %315 = vsyncpa [#allocation3], 1

</llo_original>
